<compile_context>
chip_gen: v7x
topology: tpu7x:2x2x1
jax: 0.10.0
libtpu: 0.0.40
codegen_flags: <defaults>
</compile_context>

<pallas_src>
import jax
import jax.numpy as jnp
from jax import lax
from jax.experimental import pallas as pl
from jax.experimental.pallas import tpu as pltpu


def _diversity_kernel(anchor_ref, feat_ref, out_ref):
    # anchor_ref / feat_ref: (Bt, N, D) VMEM tiles for the current batch slab.
    # out_ref: (1, 1, Bt) per-batch sums of squares of triu(cos), lane-dense.
    x = feat_ref[...].astype(jnp.float32) + anchor_ref[...].astype(jnp.float32)  # (Bt, N, D)
    Bt, N, D = x.shape

    # Row-wise normalization via rsqrt (EUP) + multiply (VPU).
    sq = jnp.sum(x * x, axis=2, keepdims=True)           # (Bt, N, 1)  ||x_i||^2
    inv = lax.rsqrt(sq)                                   # 1 / ||x_i||
    xn = x * inv                                          # (Bt, N, D)

    # ||cos||_F^2 == ||Xn Xn^T||_F^2 == ||Xn^T Xn||_F^2 : pick the cheaper Gram.
    # Contractions expressed directly via dot_general -> no explicit .T (XLU) copy.
    if D <= N:
        # (Bt, D, D) Gram: contract over N (axis 1), batch over axis 0.
        m = lax.dot_general(xn, xn, (((1,), (1,)), ((0,), (0,))),
                            preferred_element_type=jnp.float32)
    else:
        # (Bt, N, N) cosine matrix: contract over D (axis 2), batch over axis 0.
        m = lax.dot_general(xn, xn, (((2,), (2,)), ((0,), (0,))),
                            preferred_element_type=jnp.float32)
    full = jnp.sum(m * m, axis=(1, 2))                    # (Bt,)  ||cos||_F^2

    # Diagonal term: cos_ii = sq_i * inv_i^2 (reuse row sums, no extra XLU reduce).
    diag = sq * (inv * inv)                               # (Bt, N, 1)
    dterm = jnp.sum(diag * diag, axis=(1, 2))             # (Bt,)

    # Sum over upper triangle (incl. diagonal) of cos^2, by symmetry.
    ss = 0.5 * (full + dterm)                             # (Bt,)

    out_ref[...] = ss.reshape(out_ref.shape).astype(out_ref.dtype)


def _choose_block_batch(B, N, D, itemsize):
    """Pick how many batch elements each grid step processes."""
    # Per batch element: 2 inputs x 2 pipeline buffers (native dtype) + in-kernel
    # f32 working set (x, xn) + the small Gram matrix.
    per_b = 2 * 2 * N * D * itemsize + 2 * N * D * 4 + min(N, D) ** 2 * 4
    budget = 12 * 1024 * 1024  # conservative: fits v5e's 16 MiB scoped-VMEM default
    bt = max(1, budget // max(per_b, 1))
    bt = min(bt, B)
    # Keep the grid length >= 2 whenever possible so v7x's two TensorCores both
    # get work (dimension_semantics=("parallel",)).
    if B >= 2:
        bt = min(bt, -(-B // 2))
    return int(bt)


def diversity_loss(anchor_embed: jax.Array, feature: jax.Array,
                   *, block_batch: int | None = None,
                   vmem_limit_bytes: int | None = None) -> jax.Array:
    """Pallas implementation of Diversity.forward (returns a scalar)."""
    assert anchor_embed.shape == feature.shape
    B, N, D = feature.shape
    itemsize = jnp.dtype(feature.dtype).itemsize

    bt = block_batch if block_batch is not None else _choose_block_batch(B, N, D, itemsize)
    g = -(-B // bt)                 # number of grid steps
    b_pad = g * bt
    if b_pad != B:
        pad = ((0, b_pad - B), (0, 0), (0, 0))
        anchor_embed = jnp.pad(anchor_embed, pad)
        feature = jnp.pad(feature, pad)

    cp_kwargs = dict(dimension_semantics=("parallel",))
    if vmem_limit_bytes is not None:
        cp_kwargs["vmem_limit_bytes"] = vmem_limit_bytes

    per_ss = pl.pallas_call(
        _diversity_kernel,
        out_shape=jax.ShapeDtypeStruct((g, 1, bt), jnp.float32),
        grid_spec=pltpu.PrefetchScalarGridSpec(
            num_scalar_prefetch=0,
            grid=(g,),
            in_specs=[
                pl.BlockSpec((bt, N, D), lambda i: (i, 0, 0)),
                pl.BlockSpec((bt, N, D), lambda i: (i, 0, 0)),
            ],
            out_specs=pl.BlockSpec((1, 1, bt), lambda i: (i, 0, 0)),
        ),
        compiler_params=pltpu.CompilerParams(**cp_kwargs),
    )(anchor_embed, feature)

    # sqrt, /N and the batch mean stay in the JAX wrapper (off the kernel hot path).
    per_ss = per_ss.reshape(b_pad)[:B]                   # drop padded (NaN) entries
    frob = jnp.sqrt(per_ss)                              # (B,) per-batch Frobenius norm
    return jnp.mean(frob / N)


def _reference(anchor_embed, feature):
    # Pure-JAX reference mirroring the PyTorch code exactly.
    f = feature.astype(jnp.float32) + anchor_embed.astype(jnp.float32)
    B, N, D = f.shape
    norm = jnp.linalg.norm(f, axis=2, keepdims=True)
    fn = f / norm
    cos = jnp.einsum("bnd,bmd->bnm", fn, fn)
    mask = jnp.triu(jnp.ones((N, N), dtype=bool), k=0)[None]
    ut = jnp.where(mask, cos, 0.0)
    per = jnp.sqrt(jnp.sum(ut * ut, axis=(1, 2))) / N
    return jnp.mean(per)


def init_unused_linears(feature_embedding: int, key: jax.Array):
    # Mirrors nn.Linear(feature_embedding, feature_embedding) for query/key.
    # These parameters are declared by the module but never used in forward().
    k1, k2, k3, k4 = jax.random.split(key, 4)
    bound = 1.0 / jnp.sqrt(feature_embedding)
    q_w = jax.random.uniform(k1, (feature_embedding, feature_embedding),
                             minval=-bound, maxval=bound, dtype=jnp.float32)
    q_b = jax.random.uniform(k2, (feature_embedding,),
                             minval=-bound, maxval=bound, dtype=jnp.float32)
    k_w = jax.random.uniform(k3, (feature_embedding, feature_embedding),
                             minval=-bound, maxval=bound, dtype=jnp.float32)
    k_b = jax.random.uniform(k4, (feature_embedding,),
                             minval=-bound, maxval=bound, dtype=jnp.float32)
    return {"query": (q_w, q_b), "key": (k_w, k_b)}


if __name__ == "__main__":
    B, N, D = 2, 8, 32  # batch, anchors, feature_embedding
    key = jax.random.PRNGKey(0)
    k_a, k_f, k_p = jax.random.split(key, 3)

    anchor_embed = jax.random.normal(k_a, (B, N, D), dtype=jnp.float32)
    feature = jax.random.normal(k_f, (B, N, D), dtype=jnp.float32)

    _ = init_unused_linears(D, k_p)  # declared-but-unused parameters

    out = diversity_loss(anchor_embed, feature)
    out = jax.block_until_ready(out)

    ref = _reference(anchor_embed, feature)
    assert jnp.allclose(out, ref, rtol=1e-5, atol=1e-5), (out, ref)

    print("KERNEL_OK")
</pallas_src>

<mosaic_0001>
module attributes {stable_mosaic.version = 11 : i64} {
  func.func @_diversity_kernel(%arg0: i32, %arg1: memref<1x8x32xf32, #tpu.memory_space<vmem>>, %arg2: memref<1x8x32xf32, #tpu.memory_space<vmem>>, %arg3: memref<1x1x1xf32, #tpu.memory_space<vmem>>) attributes {dimension_semantics = [#tpu.dimension_semantics<parallel>], iteration_bounds = array<i64: 2>, scalar_prefetch = 0 : i64, scratch_operands = 0 : i64, tpu.core_type = #tpu.core_type<tc>, window_params = [{transform_indices = @transform_0, window_bounds = array<i64: 1, 8, 32>}, {transform_indices = @transform_1, window_bounds = array<i64: 1, 8, 32>}, {transform_indices = @transform_2, window_bounds = array<i64: 1, 1, 1>}]} {
    %c0 = arith.constant 0 : index
    %c0_0 = arith.constant 0 : index
    %c0_1 = arith.constant 0 : index
    %0 = vector.load %arg2[%c0, %c0_0, %c0_1] : memref<1x8x32xf32, #tpu.memory_space<vmem>>, vector<1x8x32xf32>
    %c0_2 = arith.constant 0 : index
    %c0_3 = arith.constant 0 : index
    %c0_4 = arith.constant 0 : index
    %1 = vector.load %arg1[%c0_2, %c0_3, %c0_4] : memref<1x8x32xf32, #tpu.memory_space<vmem>>, vector<1x8x32xf32>
    %2 = arith.addf %0, %1 : vector<1x8x32xf32>
    %3 = arith.mulf %2, %2 : vector<1x8x32xf32>
    %cst = arith.constant dense<0.000000e+00> : vector<1x8xf32>
    %4 = vector.multi_reduction <add>, %3, %cst [2] : vector<1x8x32xf32> to vector<1x8xf32>
    %5 = vector.shape_cast %4 : vector<1x8xf32> to vector<1x8x1xf32>
    %6 = math.rsqrt %5 : vector<1x8x1xf32>
    %7 = vector.broadcast %6 : vector<1x8x1xf32> to vector<1x8x32xf32>
    %8 = arith.mulf %2, %7 : vector<1x8x32xf32>
    %cst_5 = arith.constant dense<0.000000e+00> : vector<1x8x8xf32>
    %9 = tpu.matmul %8, %8, %cst_5 {dimension_numbers = #tpu.dot_dimension_numbers<[2], [2], [1], [1], [0, 0, 0, 1, 1, 1], [0], [0]>} : vector<1x8x32xf32>, vector<1x8x32xf32>, vector<1x8x8xf32> -> vector<1x8x8xf32>
    %10 = arith.mulf %9, %9 : vector<1x8x8xf32>
    %cst_6 = arith.constant dense<0.000000e+00> : vector<1xf32>
    %11 = vector.multi_reduction <add>, %10, %cst_6 [1, 2] : vector<1x8x8xf32> to vector<1xf32>
    %12 = arith.mulf %6, %6 : vector<1x8x1xf32>
    %13 = arith.mulf %5, %12 : vector<1x8x1xf32>
    %14 = arith.mulf %13, %13 : vector<1x8x1xf32>
    %cst_7 = arith.constant dense<0.000000e+00> : vector<1xf32>
    %15 = vector.multi_reduction <add>, %14, %cst_7 [1, 2] : vector<1x8x1xf32> to vector<1xf32>
    %16 = arith.addf %11, %15 : vector<1xf32>
    %cst_8 = arith.constant 5.000000e-01 : f32
    %17 = vector.broadcast %cst_8 : f32 to vector<1xf32>
    %18 = arith.mulf %17, %16 : vector<1xf32>
    %19 = vector.shape_cast %18 : vector<1xf32> to vector<1x1x1xf32>
    %c0_9 = arith.constant 0 : index
    %c0_10 = arith.constant 0 : index
    %c0_11 = arith.constant 0 : index
    %20 = vector.load %arg3[%c0_9, %c0_10, %c0_11] : memref<1x1x1xf32, #tpu.memory_space<vmem>>, vector<1x1x1xf32>
    tpu.vector_store %arg3[%c0_9, %c0_10, %c0_11], %19 {strides = array<i32>} : memref<1x1x1xf32, #tpu.memory_space<vmem>>, vector<1x1x1xf32>,
    return
  }
  func.func @transform_0(%arg0: i32) -> (i32, i32, i32) {
    %c0_i32 = arith.constant 0 : i32
    %c0_i32_0 = arith.constant 0 : i32
    %c0_i32_1 = arith.constant 0 : i32
    return %arg0, %c0_i32, %c0_i32_0 : i32, i32, i32
  }
  func.func @transform_1(%arg0: i32) -> (i32, i32, i32) {
    %c0_i32 = arith.constant 0 : i32
    %c0_i32_0 = arith.constant 0 : i32
    %c0_i32_1 = arith.constant 0 : i32
    return %arg0, %c0_i32, %c0_i32_0 : i32, i32, i32
  }
  func.func @transform_2(%arg0: i32) -> (i32, i32, i32) {
    %c0_i32 = arith.constant 0 : i32
    %c0_i32_0 = arith.constant 0 : i32
    %c0_i32_1 = arith.constant 0 : i32
    return %arg0, %c0_i32, %c0_i32_0 : i32, i32, i32
  }
}

</mosaic_0001>

<llo_original>
// kernel: tpu_custom_call.1
$region0: #{tpu_custom_call.1}
  #allocation0 [shape = 'u32[]', space=smem, size = 0x4, offset = 0x4, fixed_abs, tag = 'smem constant byte address 0x4 - core index']
  #allocation1 [shape = 'u32[144,128]{1,0:T(1,128)}', space=vmem, size = 0x12000, scoped, tag = 'internal scratch']
  %s0 = inlined_call_operand.hbm [shape: f32[2,8,32], index: 0, kind: input, shape index: {}]
  %s1 = inlined_call_operand.hbm [shape: f32[2,8,32], index: 1, kind: input, shape index: {}]
  %s2 = inlined_call_operand.vmem [shape: f32[2,1,1], index: 2, kind: output, shape index: {}]
  %s3 = sld [smem:[#allocation0]]
  $region49: #{tpu_custom_call.1} parent=0
    _
  %s5 = ssub.s32 1, %s3
  %s6 = scalar_select 0, %s5, %s3
  $region1: #{tpu_custom_call.1} parent=0
    #allocation2 [shape = 'u8[8192]{0}', space=vmem, size = 0x2000, scoped, tag = 'input window, operand 0']
    #allocation3 [shape = 's32[2]{0}', space=sflag, size = 0x8, scoped, tag = 'scoped memory for tpu_custom_call.1']
    #allocation4 [shape = 'u8[8192]{0}', space=vmem, size = 0x2000, scoped, tag = 'input window, operand 1']
    #allocation5 [shape = 's32[2]{0}', space=sflag, size = 0x8, scoped, tag = 'scoped memory for tpu_custom_call.1']
    %7 = vsyncpa [#allocation3], 0
    %s8 = scalar_lea.sflag [#allocation3], 1
    %9 = vsyncpa %s8, 0
    %10 = vsyncpa [#allocation5], 0
    %s11 = scalar_lea.sflag [#allocation5], 1
    %12 = vsyncpa %s11, 0
    loop: start=0, step=1, limit=4
    $region2: #{tpu_custom_call.1} parent=1 // loop_pre_header
      _
    $region3: #{tpu_custom_call.1} parent=1 // loop_header
      %s14 = sphi 0, %s18
      %p15 = scmp.ge.s32.totalorder %s14, 4
      %s24 = sphi 0, %s26
      %s27 = sphi 0, %s24
      %s28 = sphi 0, %s27
      %s44 = sphi 0, %s28
      %s50 = sphi 0, %s52
      %s53 = sphi 0, %s50
      %s54 = sphi 0, %s53
      %s70 = sphi 0, %s54
      %s76 = sphi 0, %s78
      %s79 = sphi 0, %s76
      %s80 = sphi 0, %s79
      %s96 = sphi 0, %s80
    $region4: #{tpu_custom_call.1} parent=1 // loop_header_branch
      %17 = sbr.rel (%p15) target = $region8
    $region5: #{tpu_custom_call.1} parent=1 // loop_body
      %s19 = ssub.s32 %s14, 1
      %s20 = ssub.s32 %s14, 2
      %s21 = sadd.s32 %s14, 1
      %s22 = ssub.s32 %s14, %s21
      %p23 = scmp.eq.s32.totalorder %s22, 0
      %s25 = sadd.s32 %s24, 1
      %s26 = scalar_select %p23, %s24, %s25
      %p29 = pneg %p23
      %p30 = scmp.eq.s32.totalorder %s14, 1
      %p31 = por %p29, %p30
      %p32 = scmp.ne.s32.totalorder %s24, %s27
      %p33 = scmp.eq.s32.totalorder %s14, 0
      %p34 = por %p32, %p33
      %p35 = scmp.ne.s32.totalorder %s24, %s27
      %p36 = scmp.eq.s32.totalorder %s19, 1
      %p37 = por %p35, %p36
      %p38 = scmp.ne.s32.totalorder %s27, %s28
      %p39 = scmp.eq.s32.totalorder %s19, 0
      %p40 = por %p38, %p39
      %p41 = scmp.ne.s32.totalorder %s27, %s28
      %p42 = scmp.eq.s32.totalorder %s20, 1
      %p43 = por %p41, %p42
      %p45 = scmp.ne.s32.totalorder %s28, %s44
      %p46 = scmp.eq.s32.totalorder %s20, 0
      %p47 = por %p45, %p46
      %s48 = ssub.s32 %s14, %s21
      %p49 = scmp.eq.s32.totalorder %s48, 0
      %s51 = sadd.s32 %s50, 1
      %s52 = scalar_select %p49, %s50, %s51
      %p55 = pneg %p49
      %p56 = scmp.eq.s32.totalorder %s14, 1
      %p57 = por %p55, %p56
      %p58 = scmp.ne.s32.totalorder %s50, %s53
      %p59 = scmp.eq.s32.totalorder %s14, 0
      %p60 = por %p58, %p59
      %p61 = scmp.ne.s32.totalorder %s50, %s53
      %p62 = scmp.eq.s32.totalorder %s19, 1
      %p63 = por %p61, %p62
      %p64 = scmp.ne.s32.totalorder %s53, %s54
      %p65 = scmp.eq.s32.totalorder %s19, 0
      %p66 = por %p64, %p65
      %p67 = scmp.ne.s32.totalorder %s53, %s54
      %p68 = scmp.eq.s32.totalorder %s20, 1
      %p69 = por %p67, %p68
      %p71 = scmp.ne.s32.totalorder %s54, %s70
      %p72 = scmp.eq.s32.totalorder %s20, 0
      %p73 = por %p71, %p72
      %s74 = ssub.s32 %s14, %s21
      %p75 = scmp.eq.s32.totalorder %s74, 0
      %s77 = sadd.s32 %s76, 1
      %s78 = scalar_select %p75, %s76, %s77
      %p81 = pneg %p75
      %p82 = scmp.eq.s32.totalorder %s14, 1
      %p83 = por %p81, %p82
      %p84 = scmp.ne.s32.totalorder %s76, %s79
      %p85 = scmp.eq.s32.totalorder %s14, 0
      %p86 = por %p84, %p85
      %p87 = scmp.ne.s32.totalorder %s76, %s79
      %p88 = scmp.eq.s32.totalorder %s19, 1
      %p89 = por %p87, %p88
      %p90 = scmp.ne.s32.totalorder %s79, %s80
      %p91 = scmp.eq.s32.totalorder %s19, 0
      %p92 = por %p90, %p91
      %p93 = scmp.ne.s32.totalorder %s79, %s80
      %p94 = scmp.eq.s32.totalorder %s20, 1
      %p95 = por %p93, %p94
      %p97 = scmp.ne.s32.totalorder %s80, %s96
      %p98 = scmp.eq.s32.totalorder %s20, 0
      %p99 = por %p97, %p98
      %p100 = scmp.le.s32.totalorder 1, %s14
      %p101 = scmp.lt.s32.totalorder %s14, 3
      %p102 = pnand %p100, %p101
      %p103 = pneg %p102
      // Predicated region
      $region9: #{tpu_custom_call.1} parent=5 // pred_check
        _
      $region10: #{tpu_custom_call.1} parent=5 // pred_check_branch
        %105 = sbr.rel (%p102) target = $region12
      $region11: #{tpu_custom_call.1} parent=5 // pred_region
        %s106 = ssub.s32 %s14, 1
      $region12: #{tpu_custom_call.1} parent=5 // pred_fallthru
        _
      %p107 = scmp.lt.s32.totalorder %s14, 2
      // Predicated region
      $region13: #{tpu_custom_call.1} parent=5 // pred_check
        %p108 = pneg %p107
      $region14: #{tpu_custom_call.1} parent=5 // pred_check_branch
        %110 = sbr.rel (%p108) target = $region16
      $region15: #{tpu_custom_call.1} parent=5 // pred_region
        // Predicated region
        $region17: #{tpu_custom_call.1} parent=15 // pred_check
          %p111 = pneg %p34
        $region18: #{tpu_custom_call.1} parent=15 // pred_check_branch
          %113 = sbr.rel (%p111) target = $region20
        $region19: #{tpu_custom_call.1} parent=15 // pred_region
          %s114 = sand.u32 %s24, 1
          %s115 = scalar_lea.sflag [#allocation3], %s114
          %s116 = sand.u32 %s24, 1
          %s117 = smul.addr %s116, 8
          %s118 = scalar_lea.vmem [#allocation2], %s117
          %s120 = ssub.s32 128, 128
          %121 = vsyncadd %s115, %s120
          %s122 = smul.addr %s14, 128
          %s123 = scalar_lea.hbm %s0, %s122
          %s125 = sshll.u32 %s118, 4
          %s126 = int_to_ptr.vmem [resolvable:$true] %s125
          %128 = dma.hbm_to_vmem [thread:$0]  %s123, 128, %s126, %s115
        $region20: #{tpu_custom_call.1} parent=15 // pred_fallthru
          _
        // Predicated region
        $region21: #{tpu_custom_call.1} parent=15 // pred_check
          %p129 = pneg %p60
        $region22: #{tpu_custom_call.1} parent=15 // pred_check_branch
          %131 = sbr.rel (%p129) target = $region24
        $region23: #{tpu_custom_call.1} parent=15 // pred_region
          %s132 = sand.u32 %s50, 1
          %s133 = scalar_lea.sflag [#allocation5], %s132
          %s134 = sand.u32 %s50, 1
          %s135 = smul.addr %s134, 8
          %s136 = scalar_lea.vmem [#allocation4], %s135
          %s138 = ssub.s32 128, 128
          %139 = vsyncadd %s133, %s138
          %s140 = smul.addr %s14, 128
          %s141 = scalar_lea.hbm %s1, %s140
          %s143 = sshll.u32 %s136, 4
          %s144 = int_to_ptr.vmem [resolvable:$true] %s143
          %146 = dma.hbm_to_vmem [thread:$0]  %s141, 128, %s144, %s133
        $region24: #{tpu_custom_call.1} parent=15 // pred_fallthru
          _
      $region16: #{tpu_custom_call.1} parent=5 // pred_fallthru
        _
      %p147 = scmp.le.s32.totalorder 1, %s14
      %p148 = scmp.lt.s32.totalorder %s14, 3
      %p149 = pnand %p147, %p148
      %p150 = pneg %p149
      // Predicated region
      $region25: #{tpu_custom_call.1} parent=5 // pred_check
        _
      $region26: #{tpu_custom_call.1} parent=5 // pred_check_branch
        %152 = sbr.rel (%p149) target = $region28
      $region27: #{tpu_custom_call.1} parent=5 // pred_region
        %s153 = ssub.s32 %s14, 1
        %s154 = sand.u32 %s27, 1
        %s155 = scalar_lea.sflag [#allocation3], %s154
        %s156 = sand.u32 %s27, 1
        %s157 = smul.addr %s156, 8
        %s158 = scalar_lea.vmem [#allocation2], %s157
        // Predicated region
        $region29: #{tpu_custom_call.1} parent=27 // pred_check
          %p159 = pneg %p40
        $region30: #{tpu_custom_call.1} parent=27 // pred_check_branch
          %161 = sbr.rel (%p159) target = $region32
        $region31: #{tpu_custom_call.1} parent=27 // pred_region
          %162 = dma.done %s155, 128
        $region32: #{tpu_custom_call.1} parent=27 // pred_fallthru
          _
        %s163 = sand.u32 %s53, 1
        %s164 = scalar_lea.sflag [#allocation5], %s163
        %s165 = sand.u32 %s53, 1
        %s166 = smul.addr %s165, 8
        %s167 = scalar_lea.vmem [#allocation4], %s166
        // Predicated region
        $region33: #{tpu_custom_call.1} parent=27 // pred_check
          %p168 = pneg %p66
        $region34: #{tpu_custom_call.1} parent=27 // pred_check_branch
          %170 = sbr.rel (%p168) target = $region36
        $region35: #{tpu_custom_call.1} parent=27 // pred_region
          %171 = dma.done %s164, 128
        $region36: #{tpu_custom_call.1} parent=27 // pred_fallthru
          _
        %s172 = sand.u32 %s27, 1
        %s173 = scalar_lea.sflag [#allocation3], %s172
        %s174 = sand.u32 %s27, 1
        %s175 = smul.addr %s174, 8
        %s176 = scalar_lea.vmem [#allocation2], %s175
        %p177 = pneg %p40
        %p178 = pneg %p37
        %s179 = sand.u32 %s53, 1
        %s180 = scalar_lea.sflag [#allocation5], %s179
        %s181 = sand.u32 %s53, 1
        %s182 = smul.addr %s181, 8
        %s183 = scalar_lea.vmem [#allocation4], %s182
        %p184 = pneg %p66
        %p185 = pneg %p63
        %p186 = pneg %p92
        %p187 = pneg %p89
        %p188 = scmp.lt.s32.totalorder %s19, 1
        %s189 = scalar_select %p188, %s19, 1
        %s190 = scalar_lea.vmem %s2, %s189
        %p191 = scmp.lt.s32.totalorder %s19, 1
        %s192 = scalar_select %p191, %s19, 1
        %s193 = scalar_lea.vmem %s2, %s192
        %v194 = vld [vmem:[%s167] sm:$0xff]
        %v195 = vld [vmem:[%s158] sm:$0xff]
        %v196 = vadd.f32 %v194, %v195
        %v197 = vmul.f32 %v196, %v196
        %vm198 = vcmask 261120
        %v199 = vsel %vm198, %v197, 0.0
        %200 = vadd.xlane.f32.xlu0 %v199
        %v201 = vpop.xlane.xlu0 %200
        %v202 = vrsqrt.pop %v201
        %v203 = vmul.f32 %v196, %v202
        %v205 = vsel %vm198, %v203, 0
        %207 = vmatprep.subr.mxu0 0.0
        %208 = vmatpush1.xpose.msra.mxu0 %v205
        %209 = vmatprep.subr.mxu0 0.0
        %210 = vmatpush1.xpose.msra.mxu0 0.0
        %211 = vmatprep.subr.mxu0 0.0
        %212 = vmatpush1.xpose.msra.mxu0 0.0
        %213 = vmatprep.subr.mxu0 0.0
        %214 = vmatpush1.xpose.msra.mxu0 0.0
        %215 = vmatprep.subr.mxu0 0.0
        %216 = vmatpush1.xpose.msra.mxu0 0.0
        %217 = vmatprep.subr.mxu0 0.0
        %218 = vmatpush1.xpose.msra.mxu0 0.0
        %219 = vmatprep.subr.mxu0 0.0
        %220 = vmatpush1.xpose.msra.mxu0 0.0
        %221 = vmatprep.subr.mxu0 0.0
        %222 = vmatpush1.xpose.msra.mxu0 0.0
        %223 = vmatprep.subr.mxu0 0.0
        %224 = vmatpush1.xpose.msra.mxu0 0.0
        %225 = vmatprep.subr.mxu0 0.0
        %226 = vmatpush1.xpose.msra.mxu0 0.0
        %227 = vmatprep.subr.mxu0 0.0
        %228 = vmatpush1.xpose.msra.mxu0 0.0
        %229 = vmatprep.subr.mxu0 0.0
        %230 = vmatpush1.xpose.msra.mxu0 0.0
        %231 = vmatprep.subr.mxu0 0.0
        %232 = vmatpush1.xpose.msra.mxu0 0.0
        %233 = vmatprep.subr.mxu0 0.0
        %234 = vmatpush1.xpose.msra.mxu0 0.0
        %235 = vmatprep.subr.mxu0 0.0
        %236 = vmatpush1.xpose.msra.mxu0 0.0
        %237 = vmatprep.subr.mxu0 0.0
        %238 = vmatpush1.xpose.msra.mxu0 0.0
        %239 = vmatprep.subr.mxu0 0.0
        %240 = vmatpush1.xpose.msra.mxu0 0.0
        %241 = vmatprep.subr.mxu0 0.0
        %242 = vmatpush1.xpose.msra.mxu0 0.0
        %243 = vmatprep.subr.mxu0 0.0
        %244 = vmatpush1.xpose.msra.mxu0 0.0
        %245 = vmatprep.subr.mxu0 0.0
        %246 = vmatpush1.xpose.msra.mxu0 0.0
        %247 = vmatprep.subr.mxu0 0.0
        %248 = vmatpush1.xpose.msra.mxu0 0.0
        %249 = vmatprep.subr.mxu0 0.0
        %250 = vmatpush1.xpose.msra.mxu0 0.0
        %251 = vmatprep.subr.mxu0 0.0
        %252 = vmatpush1.xpose.msra.mxu0 0.0
        %253 = vmatprep.subr.mxu0 0.0
        %254 = vmatpush1.xpose.msra.mxu0 0.0
        %255 = vmatprep.subr.mxu0 0.0
        %256 = vmatpush1.xpose.msra.mxu0 0.0
        %257 = vmatprep.subr.mxu0 0.0
        %258 = vmatpush1.xpose.msra.mxu0 0.0
        %259 = vmatprep.subr.mxu0 0.0
        %260 = vmatpush1.xpose.msra.mxu0 0.0
        %261 = vmatprep.subr.mxu0 0.0
        %262 = vmatpush1.xpose.msra.mxu0 0.0
        %263 = vmatprep.subr.mxu0 0.0
        %264 = vmatpush1.xpose.msra.mxu0 0.0
        %265 = vmatprep.subr.mxu0 0.0
        %266 = vmatpush1.xpose.msra.mxu0 0.0
        %267 = vmatprep.subr.mxu0 0.0
        %268 = vmatpush1.xpose.msra.mxu0 0.0
        %269 = vmatprep.subr.mxu0 0.0
        %270 = vmatpush1.xpose.msra.mxu0 0.0
        %271 = vmatprep.mubr.f32.mxu0 0.0
        %272 = vmatmul.mubr.f32.gmra.mrb[0].mxu0 %v205
        %v273 = vpop.f32.mrb[0].mxu0
        %v274 = vadd.f32 0.0, %v273
        %v275 = vpop.f32.mrb[0].mxu0
        %276 = vdwg.mxu0
        %v277 = vmul.f32 %v274, %v274
        %vm278 = vcmask 64512
        %v279 = vsel %vm278, %v277, 0.0
        %280 = vadd.xlane.f32.xlu0 %v279
        %v281 = vpop.xlane.xlu0 %280
        %v282 = vrot.slane %v281, 4
        %v283 = vadd.f32 %v281, %v282
        %v284 = vrot.slane %v283, 2
        %v285 = vadd.f32 %v283, %v284
        %v286 = vrot.slane %v285, 1
        %v287 = vadd.f32 %v285, %v286
        %v288 = vmul.f32 %v202, %v202
        %v289 = vmul.f32 %v201, %v288
        %v290 = vmul.f32 %v289, %v289
        %vm291 = vcmask 7168
        %v292 = vsel %vm291, %v290, 0.0
        %293 = vadd.xlane.f32.xlu0 %v292
        %v294 = vpop.xlane.xlu0 %293
        %v295 = vrot.slane %v294, 4
        %v296 = vadd.f32 %v294, %v295
        %v297 = vrot.slane %v296, 2
        %v298 = vadd.f32 %v296, %v297
        %v299 = vrot.slane %v298, 1
        %v300 = vadd.f32 %v298, %v299
        %v301 = vadd.f32 %v287, %v300
        %v302 = vmul.f32 %v301, 0.5
        %vm303 = vcmask 0
        %304 = vst.msk [vmem:[%s193] sm:$0x1] %vm303, %v302
        %p305 = scmp.lt.s32.totalorder %s19, 1
        %s306 = scalar_select %p305, %s19, 1
        %s307 = scalar_lea.vmem %s2, %s306
        // Predicated region
        $region37: #{tpu_custom_call.1} parent=27 // pred_check
          %p308 = pneg %p89
        $region38: #{tpu_custom_call.1} parent=27 // pred_check_branch
          %310 = sbr.rel (%p308) target = $region40
        $region39: #{tpu_custom_call.1} parent=27 // pred_region
          _
        $region40: #{tpu_custom_call.1} parent=27 // pred_fallthru
          _
      $region28: #{tpu_custom_call.1} parent=5 // pred_fallthru
        _
      %p311 = scmp.le.s32.totalorder 2, %s14
      // Predicated region
      $region41: #{tpu_custom_call.1} parent=5 // pred_check
        %p312 = pneg %p311
      $region42: #{tpu_custom_call.1} parent=5 // pred_check_branch
        %314 = sbr.rel (%p312) target = $region44
      $region43: #{tpu_custom_call.1} parent=5 // pred_region
        %s315 = ssub.s32 %s14, 2
        // Predicated region
        $region45: #{tpu_custom_call.1} parent=43 // pred_check
          %p316 = pneg %p95
        $region46: #{tpu_custom_call.1} parent=43 // pred_check_branch
          %318 = sbr.rel (%p316) target = $region48
        $region47: #{tpu_custom_call.1} parent=43 // pred_region
          %p319 = scmp.lt.s32.totalorder %s20, 1
          %s320 = scalar_select %p319, %s20, 1
          %s321 = scalar_lea.vmem %s2, %s320
        $region48: #{tpu_custom_call.1} parent=43 // pred_fallthru
          _
      $region44: #{tpu_custom_call.1} parent=5 // pred_fallthru
        _
    $region6: #{tpu_custom_call.1} parent=1 // loop_footer
      %s18 = sadd.s32 1, %s14
    $region7: #{tpu_custom_call.1} parent=1 // loop_footer_branch
      %13 = sbr.rel target = $region3
    $region8: #{tpu_custom_call.1} parent=1 // loop_exit
      _
    %322 = vsyncpa [#allocation3], 1
    %s323 = scalar_lea.sflag [#allocation3], 1
    %324 = vsyncpa %s323, 1
    %325 = vsyncpa [#allocation5], 1
    %s326 = scalar_lea.sflag [#allocation5], 1
    %327 = vsyncpa %s326, 1

</llo_original>
